<compile_context>
chip_gen: v5e
topology: v5e:2x2
jax: 0.10.0
libtpu: 0.0.40
codegen_flags: <defaults>
</compile_context>

<pallas_src>
import jax
import jax.numpy as jnp
from jax import lax
from jax.experimental import pallas as pl
from jax.experimental.pallas import tpu as pltpu


def _round_up(x: int, m: int) -> int:
    return ((x + m - 1) // m) * m


def _sublane(dtype) -> int:
    # Packed sub-32-bit dtypes need (16,128) / (32,128) aligned tiles.
    return {4: 8, 2: 16, 1: 32}.get(jnp.dtype(dtype).itemsize, 8)


def linear_nobias_kernel(x_ref, w_ref, o_ref):
    """One (tm, tn) output tile of  out = x @ W.T.

    x_ref: (tm, K)  node features
    w_ref: (tn, K)  Linear weight rows in native torch [dim, type_dim] layout
    o_ref: (tm, tn) float32 output tile
    Dropout (eval mode) == identity, so this projection is the whole forward pass.
    """
    o_ref[...] = lax.dot_general(
        x_ref[...],
        w_ref[...],
        dimension_numbers=(((1,), (1,)), ((), ())),  # contract K x K; MXU-native trans-RHS
        preferred_element_type=jnp.float32,
    ).astype(o_ref.dtype)


def node_attr_encoder_forward(
    x,
    weight,
    *,
    block_rows: int = 512,
    compute_dtype=None,
    weight_resident_bytes: int = 16 << 20,
):
    """node_attr_encoder.forward (use_type_info branch), inference semantics.

    x:       [N, type_dim]   node attribute / type features
    weight:  [dim, type_dim] torch.nn.Linear(type_dim, dim, bias=False).weight
    returns: [N, dim] float32  ==  x @ weight.T   (Dropout eval mode == identity)

    compute_dtype: e.g. jnp.bfloat16 feeds the MXU in bf16 (f32 accumulation) and halves
    input DMA bytes; default None preserves the module's f32 numerics exactly.
    """
    n, k = x.shape
    d, k_w = weight.shape
    assert k_w == k, "weight must be [dim, type_dim]"

    if compute_dtype is not None:
        x = x.astype(compute_dtype)
        weight = weight.astype(compute_dtype)
    itemsize = jnp.dtype(x.dtype).itemsize
    sub = _sublane(x.dtype)

    # ---- row (N) tiling: full-extent or exactly-dividing blocks -> no padding ----
    max_rows = max(sub, _round_up(block_rows, 128))
    if n > max_rows:
        tm = max_rows
        n_pad = _round_up(n, tm)
    elif n % (2 * sub) == 0 and n >= 2 * sub:
        tm = n // 2  # two row tiles: both v7x TensorCores busy, still no padding
        n_pad = n
    else:
        tm = n  # single full-extent block: always layout-legal, no padding
        n_pad = n

    # ---- weight: fully VMEM-resident when small (the normal case), else D-tiled ----
    if d * k * itemsize <= weight_resident_bytes:
        tn = d
        d_pad = d
    else:
        # Fallback for very large `dim`: lane-dense (multiple-of-128) weight tiles.
        tn = max(128, min(_round_up(d, 128),
                          ((4 << 20) // (k * itemsize)) // 128 * 128))
        d_pad = _round_up(d, tn)

    if n_pad != n:
        x = jnp.pad(x, ((0, n_pad - n), (0, 0)))
    if d_pad != d:
        weight = jnp.pad(weight, ((0, d_pad - d), (0, 0)))

    # Weight axis OUTERMOST: its block index is constant while rows sweep, so Mosaic
    # skips the weight DMA on every step after the first (true residency when d fits).
    grid = (d_pad // tn, n_pad // tm)

    out_bytes = 4
    vmem_est = 2 * (tm * k + tn * k) * itemsize + 2 * (tm * tn * out_bytes)
    vmem_limit = min(48 << 20, max(32 << 20, vmem_est + (8 << 20)))

    cost = pl.CostEstimate(
        flops=2 * n_pad * k * d_pad,
        transcendentals=0,
        bytes_accessed=(n_pad * k + d_pad * k) * itemsize + n_pad * d_pad * out_bytes,
    )

    out = pl.pallas_call(
        linear_nobias_kernel,
        out_shape=jax.ShapeDtypeStruct((n_pad, d_pad), jnp.float32),
        grid_spec=pltpu.PrefetchScalarGridSpec(
            num_scalar_prefetch=0,
            grid=grid,
            in_specs=[
                pl.BlockSpec((tm, k), lambda j, i: (i, 0)),  # x row tile (full K block)
                pl.BlockSpec((tn, k), lambda j, i: (j, 0)),  # weight tile (constant idx)
            ],
            out_specs=pl.BlockSpec((tm, tn), lambda j, i: (i, j)),
        ),
        compiler_params=pltpu.CompilerParams(
            dimension_semantics=("parallel", "parallel"),
            vmem_limit_bytes=vmem_limit,
        ),
        cost_estimate=cost,
    )(x, weight)

    if n_pad != n or d_pad != d:
        out = out[:n, :d]
    return out


if __name__ == "__main__":
    key = jax.random.PRNGKey(0)
    k_x, k_w = jax.random.split(key)

    # Small shapes consistent with the module: N=256 nodes, type_dim=32, dim=128.
    N, TYPE_DIM, DIM = 256, 32, 128

    x = jax.random.normal(k_x, (N, TYPE_DIM), dtype=jnp.float32)
    # xavier_uniform-style init for Linear(type_dim, dim, bias=False).weight: [dim, type_dim]
    limit = jnp.sqrt(6.0 / (TYPE_DIM + DIM))
    weight = jax.random.uniform(
        k_w, (DIM, TYPE_DIM), minval=-limit, maxval=limit, dtype=jnp.float32
    )

    # f32 path (exact module semantics).
    out = node_attr_encoder_forward(x, weight)
    jax.block_until_ready(out)

    ref = x @ weight.T
    assert out.shape == (N, DIM)
    assert bool(jnp.allclose(out, ref, atol=1e-4, rtol=1e-4))

    # bf16 MXU/DMA path (helps on all generations; f32 accumulation).
    out_bf16 = node_attr_encoder_forward(x, weight, compute_dtype=jnp.bfloat16)
    jax.block_until_ready(out_bf16)
    assert out_bf16.shape == (N, DIM)
    assert bool(jnp.allclose(out_bf16, ref, atol=5e-2, rtol=5e-2))

    print("KERNEL_OK")
</pallas_src>

<mosaic_0001>
module attributes {stable_mosaic.version = 11 : i64} {
  func.func @linear_nobias_kernel(%arg0: i32, %arg1: i32, %arg2: memref<128x32xf32, #tpu.memory_space<vmem>>, %arg3: memref<128x32xf32, #tpu.memory_space<vmem>>, %arg4: memref<128x128xf32, #tpu.memory_space<vmem>>) attributes {dimension_semantics = [#tpu.dimension_semantics<parallel>, #tpu.dimension_semantics<parallel>], iteration_bounds = array<i64: 1, 2>, scalar_prefetch = 0 : i64, scratch_operands = 0 : i64, tpu.core_type = #tpu.core_type<tc>, window_params = [{transform_indices = @transform_0, window_bounds = array<i64: 128, 32>}, {transform_indices = @transform_1, window_bounds = array<i64: 128, 32>}, {transform_indices = @transform_2, window_bounds = array<i64: 128, 128>}]} {
    %c0 = arith.constant 0 : index
    %c0_0 = arith.constant 0 : index
    %0 = vector.load %arg2[%c0, %c0_0] : memref<128x32xf32, #tpu.memory_space<vmem>>, vector<128x32xf32>
    %c0_1 = arith.constant 0 : index
    %c0_2 = arith.constant 0 : index
    %1 = vector.load %arg3[%c0_1, %c0_2] : memref<128x32xf32, #tpu.memory_space<vmem>>, vector<128x32xf32>
    %cst = arith.constant dense<0.000000e+00> : vector<128x128xf32>
    %2 = tpu.matmul %0, %1, %cst {dimension_numbers = #tpu.dot_dimension_numbers<[1], [1], [0], [0], [0, 0, 1, 0], [], []>} : vector<128x32xf32>, vector<128x32xf32>, vector<128x128xf32> -> vector<128x128xf32>
    %c0_3 = arith.constant 0 : index
    %c0_4 = arith.constant 0 : index
    %3 = vector.load %arg4[%c0_3, %c0_4] : memref<128x128xf32, #tpu.memory_space<vmem>>, vector<128x128xf32>
    tpu.vector_store %arg4[%c0_3, %c0_4], %2 {strides = array<i32>} : memref<128x128xf32, #tpu.memory_space<vmem>>, vector<128x128xf32>,
    return
  }
  func.func @transform_0(%arg0: i32, %arg1: i32) -> (i32, i32) {
    %c0_i32 = arith.constant 0 : i32
    %c0_i32_0 = arith.constant 0 : i32
    return %arg1, %c0_i32 : i32, i32
  }
  func.func @transform_1(%arg0: i32, %arg1: i32) -> (i32, i32) {
    %c0_i32 = arith.constant 0 : i32
    %c0_i32_0 = arith.constant 0 : i32
    return %arg0, %c0_i32 : i32, i32
  }
  func.func @transform_2(%arg0: i32, %arg1: i32) -> (i32, i32) {
    %c0_i32 = arith.constant 0 : i32
    return %arg1, %arg0 : i32, i32
  }
}

</mosaic_0001>

<llo_original>
// kernel: tpu_custom_call.1
$region0: #{tpu_custom_call.1}
  #allocation0 [shape = 'u32[]', space=smem, size = 0x4, offset = 0x4, fixed_abs, tag = 'smem constant byte address 0x4 - core index']
  #allocation1 [shape = 'u32[72,128]{1,0:T(1,128)}', space=vmem, size = 0x9000, scoped, tag = 'internal scratch']
  %s0 = inlined_call_operand.vmem [shape: f32[256,32], index: 0, kind: input, shape index: {}]
  %s1 = inlined_call_operand.vmem [shape: f32[128,32], index: 1, kind: input, shape index: {}]
  %s2 = inlined_call_operand.hbm [shape: f32[256,128], index: 2, kind: output, shape index: {}]
  %s3 = sld [smem:[#allocation0]]
  $region41: #{tpu_custom_call.1} parent=0
    _
  %s5 = ssub.s32 1, %s3
  %s6 = scalar_select 0, %s5, %s3
  $region1: #{tpu_custom_call.1} parent=0
    #allocation2 [shape = 'u8[131072]{0}', space=vmem, size = 0x20000, scoped, tag = 'output window, operand 0']
    #allocation3 [shape = 's32[2]{0}', space=sflag, size = 0x8, scoped, tag = 'scoped memory for tpu_custom_call.1']
    %7 = vsyncpa [#allocation3], 0
    %s8 = scalar_lea.sflag [#allocation3], 1
    %9 = vsyncpa %s8, 0
    loop: start=0, step=1, limit=4
    $region2: #{tpu_custom_call.1} parent=1 // loop_pre_header
      _
    $region3: #{tpu_custom_call.1} parent=1 // loop_header
      %s11 = sphi 0, %s15
      %p12 = scmp.ge.s32.totalorder %s11, 4
      %s18 = sphi 0, %s30
      %s19 = sphi 0, %s26
      %s20 = sphi 0, %s18
      %s21 = sphi 0, %s19
      %s22 = sphi 0, %s20
      %s23 = sphi 0, %s21
      %s33 = sphi 0, %s35
      %s36 = sphi 0, %s33
      %s37 = sphi 0, %s36
      %s53 = sphi 0, %s37
      %s59 = sphi 0, %s61
      %s62 = sphi 0, %s59
      %s63 = sphi 0, %s62
      %s79 = sphi 0, %s63
      %s87 = sphi 0, %s89
      %s90 = sphi 0, %s87
      %s91 = sphi 0, %s90
      %s107 = sphi 0, %s91
    $region4: #{tpu_custom_call.1} parent=1 // loop_header_branch
      %14 = sbr.rel (%p12) target = $region8
    $region5: #{tpu_custom_call.1} parent=1 // loop_body
      %s16 = ssub.s32 %s11, 1
      %s17 = ssub.s32 %s11, 2
      %s24 = sadd.s32 1, %s19
      %p25 = scmp.ge.s32.totalorder %s24, 2
      %s26 = scalar_select %p25, 0, %s24
      %s27 = sadd.s32 1, %s18
      %s28 = scalar_select %p25, %s27, %s18
      %p29 = scmp.ge.s32.totalorder %s28, 1
      %s30 = scalar_select %p29, 0, %s28
      %s31 = ssub.s32 %s19, %s26
      %p32 = scmp.eq.s32.totalorder %s31, 0
      %s34 = sadd.s32 %s33, 1
      %s35 = scalar_select %p32, %s33, %s34
      %p38 = pneg %p32
      %p39 = scmp.eq.s32.totalorder %s11, 1
      %p40 = por %p38, %p39
      %p41 = scmp.ne.s32.totalorder %s33, %s36
      %p42 = scmp.eq.s32.totalorder %s11, 0
      %p43 = por %p41, %p42
      %p44 = scmp.ne.s32.totalorder %s33, %s36
      %p45 = scmp.eq.s32.totalorder %s16, 1
      %p46 = por %p44, %p45
      %p47 = scmp.ne.s32.totalorder %s36, %s37
      %p48 = scmp.eq.s32.totalorder %s16, 0
      %p49 = por %p47, %p48
      %p50 = scmp.ne.s32.totalorder %s36, %s37
      %p51 = scmp.eq.s32.totalorder %s17, 1
      %p52 = por %p50, %p51
      %p54 = scmp.ne.s32.totalorder %s37, %s53
      %p55 = scmp.eq.s32.totalorder %s17, 0
      %p56 = por %p54, %p55
      %s57 = ssub.s32 %s18, %s30
      %p58 = scmp.eq.s32.totalorder %s57, 0
      %s60 = sadd.s32 %s59, 1
      %s61 = scalar_select %p58, %s59, %s60
      %p64 = pneg %p58
      %p65 = scmp.eq.s32.totalorder %s11, 1
      %p66 = por %p64, %p65
      %p67 = scmp.ne.s32.totalorder %s59, %s62
      %p68 = scmp.eq.s32.totalorder %s11, 0
      %p69 = por %p67, %p68
      %p70 = scmp.ne.s32.totalorder %s59, %s62
      %p71 = scmp.eq.s32.totalorder %s16, 1
      %p72 = por %p70, %p71
      %p73 = scmp.ne.s32.totalorder %s62, %s63
      %p74 = scmp.eq.s32.totalorder %s16, 0
      %p75 = por %p73, %p74
      %p76 = scmp.ne.s32.totalorder %s62, %s63
      %p77 = scmp.eq.s32.totalorder %s17, 1
      %p78 = por %p76, %p77
      %p80 = scmp.ne.s32.totalorder %s63, %s79
      %p81 = scmp.eq.s32.totalorder %s17, 0
      %p82 = por %p80, %p81
      %s83 = ssub.s32 %s19, %s26
      %s84 = ssub.s32 %s18, %s30
      %s85 = sor.u32 %s83, %s84
      %p86 = scmp.eq.s32.totalorder %s85, 0
      %s88 = sadd.s32 %s87, 1
      %s89 = scalar_select %p86, %s87, %s88
      %p92 = pneg %p86
      %p93 = scmp.eq.s32.totalorder %s11, 1
      %p94 = por %p92, %p93
      %p95 = scmp.ne.s32.totalorder %s87, %s90
      %p96 = scmp.eq.s32.totalorder %s11, 0
      %p97 = por %p95, %p96
      %p98 = scmp.ne.s32.totalorder %s87, %s90
      %p99 = scmp.eq.s32.totalorder %s16, 1
      %p100 = por %p98, %p99
      %p101 = scmp.ne.s32.totalorder %s90, %s91
      %p102 = scmp.eq.s32.totalorder %s16, 0
      %p103 = por %p101, %p102
      %p104 = scmp.ne.s32.totalorder %s90, %s91
      %p105 = scmp.eq.s32.totalorder %s17, 1
      %p106 = por %p104, %p105
      %p108 = scmp.ne.s32.totalorder %s91, %s107
      %p109 = scmp.eq.s32.totalorder %s17, 0
      %p110 = por %p108, %p109
      %p111 = scmp.le.s32.totalorder 1, %s11
      %p112 = scmp.lt.s32.totalorder %s11, 3
      %p113 = pnand %p111, %p112
      %p114 = pneg %p113
      // Predicated region
      $region9: #{tpu_custom_call.1} parent=5 // pred_check
        _
      $region10: #{tpu_custom_call.1} parent=5 // pred_check_branch
        %116 = sbr.rel (%p113) target = $region12
      $region11: #{tpu_custom_call.1} parent=5 // pred_region
        %s117 = ssub.s32 %s11, 1
        // Predicated region
        $region13: #{tpu_custom_call.1} parent=11 // pred_check
          %p118 = pneg %p75
        $region14: #{tpu_custom_call.1} parent=11 // pred_check_branch
          %120 = sbr.rel (%p118) target = $region16
        $region15: #{tpu_custom_call.1} parent=11 // pred_region
          %s121 = smul.u32 16, %s20
          %p122 = scmp.lt.s32.totalorder %s121, 15
          %s123 = scalar_select %p122, %s121, 15
          %s124 = smul.addr %s123, 8
          %s125 = scalar_lea.vmem %s1, %s124
          %s126 = smul.u32 16, %s20
        $region16: #{tpu_custom_call.1} parent=11 // pred_fallthru
          _
      $region12: #{tpu_custom_call.1} parent=5 // pred_fallthru
        _
      %p127 = scmp.lt.s32.totalorder %s11, 2
      // Predicated region
      $region17: #{tpu_custom_call.1} parent=5 // pred_check
        %p128 = pneg %p127
      $region18: #{tpu_custom_call.1} parent=5 // pred_check_branch
        %130 = sbr.rel (%p128) target = $region20
      $region19: #{tpu_custom_call.1} parent=5 // pred_region
        // Predicated region
        $region21: #{tpu_custom_call.1} parent=19 // pred_check
          %p131 = pneg %p43
        $region22: #{tpu_custom_call.1} parent=19 // pred_check_branch
          %133 = sbr.rel (%p131) target = $region24
        $region23: #{tpu_custom_call.1} parent=19 // pred_region
          %s134 = smul.u32 16, %s19
          %p135 = scmp.lt.s32.totalorder %s134, 31
          %s136 = scalar_select %p135, %s134, 31
          %s137 = smul.addr %s136, 8
          %s138 = scalar_lea.vmem %s0, %s137
          %s139 = smul.u32 16, %s19
        $region24: #{tpu_custom_call.1} parent=19 // pred_fallthru
          _
      $region20: #{tpu_custom_call.1} parent=5 // pred_fallthru
        _
      %p140 = scmp.le.s32.totalorder 1, %s11
      %p141 = scmp.lt.s32.totalorder %s11, 3
      %p142 = pnand %p140, %p141
      %p143 = pneg %p142
      // Predicated region
      $region25: #{tpu_custom_call.1} parent=5 // pred_check
        _
      $region26: #{tpu_custom_call.1} parent=5 // pred_check_branch
        %145 = sbr.rel (%p142) target = $region28
      $region27: #{tpu_custom_call.1} parent=5 // pred_region
        %s146 = ssub.s32 %s11, 1
        %s147 = smul.u32 16, %s21
        %p148 = scmp.lt.s32.totalorder %s147, 31
        %s149 = scalar_select %p148, %s147, 31
        %s150 = smul.addr %s149, 8
        %s151 = scalar_lea.vmem %s0, %s150
        %p152 = pneg %p49
        %p153 = pneg %p46
        %s154 = smul.u32 16, %s20
        %p155 = scmp.lt.s32.totalorder %s154, 15
        %s156 = scalar_select %p155, %s154, 15
        %s157 = smul.addr %s156, 8
        %s158 = scalar_lea.vmem %s1, %s157
        %p159 = pneg %p75
        %p160 = pneg %p72
        %p161 = pneg %p103
        %p162 = pneg %p100
        %s163 = sand.u32 %s90, 1
        %s164 = scalar_lea.sflag [#allocation3], %s163
        %s165 = sand.u32 %s90, 1
        %s166 = smul.addr %s165, 128
        %s167 = scalar_lea.vmem [#allocation2], %s166
        %s168 = smul.u32 16, %s21
        %p169 = scmp.lt.s32.totalorder %s168, 31
        %s170 = scalar_select %p169, %s168, 31
        %s171 = smul.addr %s170, 8
        %s172 = scalar_lea.vmem %s0, %s171
        %s173 = smul.u32 16, %s21
        %s174 = smul.u32 16, %s20
        %p175 = scmp.lt.s32.totalorder %s174, 15
        %s176 = scalar_select %p175, %s174, 15
        %s177 = smul.addr %s176, 8
        %s178 = scalar_lea.vmem %s1, %s177
        %s179 = smul.u32 16, %s20
        %s180 = smul.u32 16, %s21
        %v181 = vld [vmem:[%s172] sm:$0xff]
        %v182 = vld [vmem:[%s172 + $0x8] sm:$0xff]
        %v183 = vld [vmem:[%s172 + $0x10] sm:$0xff]
        %v184 = vld [vmem:[%s172 + $0x18] sm:$0xff]
        %v185 = vld [vmem:[%s172 + $0x20] sm:$0xff]
        %v186 = vld [vmem:[%s172 + $0x28] sm:$0xff]
        %v187 = vld [vmem:[%s172 + $0x30] sm:$0xff]
        %v188 = vld [vmem:[%s172 + $0x38] sm:$0xff]
        %v189 = vld [vmem:[%s172 + $0x40] sm:$0xff]
        %v190 = vld [vmem:[%s172 + $0x48] sm:$0xff]
        %v191 = vld [vmem:[%s172 + $0x50] sm:$0xff]
        %v192 = vld [vmem:[%s172 + $0x58] sm:$0xff]
        %v193 = vld [vmem:[%s172 + $0x60] sm:$0xff]
        %v194 = vld [vmem:[%s172 + $0x68] sm:$0xff]
        %v195 = vld [vmem:[%s172 + $0x70] sm:$0xff]
        %v196 = vld [vmem:[%s172 + $0x78] sm:$0xff]
        %v197 = vld [vmem:[%s178] sm:$0xff]
        %v198 = vld [vmem:[%s178 + $0x8] sm:$0xff]
        %v199 = vld [vmem:[%s178 + $0x10] sm:$0xff]
        %v200 = vld [vmem:[%s178 + $0x18] sm:$0xff]
        %v201 = vld [vmem:[%s178 + $0x20] sm:$0xff]
        %v202 = vld [vmem:[%s178 + $0x28] sm:$0xff]
        %v203 = vld [vmem:[%s178 + $0x30] sm:$0xff]
        %v204 = vld [vmem:[%s178 + $0x38] sm:$0xff]
        %v205 = vld [vmem:[%s178 + $0x40] sm:$0xff]
        %v206 = vld [vmem:[%s178 + $0x48] sm:$0xff]
        %v207 = vld [vmem:[%s178 + $0x50] sm:$0xff]
        %v208 = vld [vmem:[%s178 + $0x58] sm:$0xff]
        %v209 = vld [vmem:[%s178 + $0x60] sm:$0xff]
        %v210 = vld [vmem:[%s178 + $0x68] sm:$0xff]
        %v211 = vld [vmem:[%s178 + $0x70] sm:$0xff]
        %v212 = vld [vmem:[%s178 + $0x78] sm:$0xff]
        %vm213 = vcmask 261120
        %v215 = vsel %vm213, %v181, 0
        %v218 = vsel %vm213, %v182, 0
        %v221 = vsel %vm213, %v183, 0
        %v224 = vsel %vm213, %v184, 0
        %v227 = vsel %vm213, %v185, 0
        %v230 = vsel %vm213, %v186, 0
        %v233 = vsel %vm213, %v187, 0
        %v236 = vsel %vm213, %v188, 0
        %v239 = vsel %vm213, %v189, 0
        %v242 = vsel %vm213, %v190, 0
        %v245 = vsel %vm213, %v191, 0
        %v248 = vsel %vm213, %v192, 0
        %v251 = vsel %vm213, %v193, 0
        %v254 = vsel %vm213, %v194, 0
        %v257 = vsel %vm213, %v195, 0
        %v260 = vsel %vm213, %v196, 0
        %v263 = vsel %vm213, %v197, 0
        %v266 = vsel %vm213, %v198, 0
        %v269 = vsel %vm213, %v199, 0
        %v272 = vsel %vm213, %v200, 0
        %v275 = vsel %vm213, %v201, 0
        %v278 = vsel %vm213, %v202, 0
        %v281 = vsel %vm213, %v203, 0
        %v284 = vsel %vm213, %v204, 0
        %v287 = vsel %vm213, %v205, 0
        %v290 = vsel %vm213, %v206, 0
        %v293 = vsel %vm213, %v207, 0
        %v296 = vsel %vm213, %v208, 0
        %v299 = vsel %vm213, %v209, 0
        %v302 = vsel %vm213, %v210, 0
        %v305 = vsel %vm213, %v211, 0
        %v308 = vsel %vm213, %v212, 0
        %310 = vmatpush.xpose.msra.mxu0 %v308
        %311 = vmatpush.xpose.msra.mxu0 %v305
        %312 = vmatpush.xpose.msra.mxu0 %v302
        %313 = vmatpush.xpose.msra.mxu0 %v299
        %314 = vmatpush.xpose.msra.mxu0 %v296
        %315 = vmatpush.xpose.msra.mxu0 %v293
        %316 = vmatpush.xpose.msra.mxu0 %v290
        %317 = vmatpush.xpose.msra.mxu0 %v287
        %318 = vmatpush.xpose.msra.mxu0 %v284
        %319 = vmatpush.xpose.msra.mxu0 %v281
        %320 = vmatpush.xpose.msra.mxu0 %v278
        %321 = vmatpush.xpose.msra.mxu0 %v275
        %322 = vmatpush.xpose.msra.mxu0 %v272
        %323 = vmatpush.xpose.msra.mxu0 %v269
        %324 = vmatpush.xpose.msra.mxu0 %v266
        %325 = vmatpush.xpose.msra.mxu0 %v263
        %326 = vmatmul.f32.gmra.mxu0 %v215
        %v327 = vpop.f32.mrf.mxu0
        %v328 = vadd.f32 0.0, %v327
        %329 = vmatmul.f32.gmra.mxu0 %v218
        %v330 = vpop.f32.mrf.mxu0
        %v331 = vadd.f32 0.0, %v330
        %332 = vmatmul.f32.gmra.mxu0 %v221
        %v333 = vpop.f32.mrf.mxu0
        %v334 = vadd.f32 0.0, %v333
        %335 = vmatmul.f32.gmra.mxu0 %v224
        %v336 = vpop.f32.mrf.mxu0
        %v337 = vadd.f32 0.0, %v336
        %338 = vmatmul.f32.gmra.mxu0 %v227
        %v339 = vpop.f32.mrf.mxu0
        %v340 = vadd.f32 0.0, %v339
        %341 = vmatmul.f32.gmra.mxu0 %v230
        %v342 = vpop.f32.mrf.mxu0
        %v343 = vadd.f32 0.0, %v342
        %344 = vmatmul.f32.gmra.mxu0 %v233
        %v345 = vpop.f32.mrf.mxu0
        %v346 = vadd.f32 0.0, %v345
        %347 = vmatmul.f32.gmra.mxu0 %v236
        %v348 = vpop.f32.mrf.mxu0
        %v349 = vadd.f32 0.0, %v348
        %350 = vmatmul.f32.gmra.mxu0 %v239
        %v351 = vpop.f32.mrf.mxu0
        %v352 = vadd.f32 0.0, %v351
        %353 = vmatmul.f32.gmra.mxu0 %v242
        %v354 = vpop.f32.mrf.mxu0
        %v355 = vadd.f32 0.0, %v354
        %356 = vmatmul.f32.gmra.mxu0 %v245
        %v357 = vpop.f32.mrf.mxu0
        %v358 = vadd.f32 0.0, %v357
        %359 = vmatmul.f32.gmra.mxu0 %v248
        %v360 = vpop.f32.mrf.mxu0
        %v361 = vadd.f32 0.0, %v360
        %362 = vmatmul.f32.gmra.mxu0 %v251
        %v363 = vpop.f32.mrf.mxu0
        %v364 = vadd.f32 0.0, %v363
        %365 = vmatmul.f32.gmra.mxu0 %v254
        %v366 = vpop.f32.mrf.mxu0
        %v367 = vadd.f32 0.0, %v366
        %368 = vmatmul.f32.gmra.mxu0 %v257
        %v369 = vpop.f32.mrf.mxu0
        %v370 = vadd.f32 0.0, %v369
        %371 = vmatmul.f32.gmra.mxu0 %v260
        %v372 = vpop.f32.mrf.mxu0
        %v373 = vadd.f32 0.0, %v372
        %374 = vdwg.mxu0
        %375 = vst [vmem:[%s167] sm:$0xff] %v328
        %376 = vst [vmem:[%s167 + $0x8] sm:$0xff] %v331
        %377 = vst [vmem:[%s167 + $0x10] sm:$0xff] %v334
        %378 = vst [vmem:[%s167 + $0x18] sm:$0xff] %v337
        %379 = vst [vmem:[%s167 + $0x20] sm:$0xff] %v340
        %380 = vst [vmem:[%s167 + $0x28] sm:$0xff] %v343
        %381 = vst [vmem:[%s167 + $0x30] sm:$0xff] %v346
        %382 = vst [vmem:[%s167 + $0x38] sm:$0xff] %v349
        %383 = vst [vmem:[%s167 + $0x40] sm:$0xff] %v352
        %384 = vst [vmem:[%s167 + $0x48] sm:$0xff] %v355
        %385 = vst [vmem:[%s167 + $0x50] sm:$0xff] %v358
        %386 = vst [vmem:[%s167 + $0x58] sm:$0xff] %v361
        %387 = vst [vmem:[%s167 + $0x60] sm:$0xff] %v364
        %388 = vst [vmem:[%s167 + $0x68] sm:$0xff] %v367
        %389 = vst [vmem:[%s167 + $0x70] sm:$0xff] %v370
        %390 = vst [vmem:[%s167 + $0x78] sm:$0xff] %v373
        %s391 = sand.u32 %s90, 1
        %s392 = scalar_lea.sflag [#allocation3], %s391
        %s393 = sand.u32 %s90, 1
        %s394 = smul.addr %s393, 128
        %s395 = scalar_lea.vmem [#allocation2], %s394
        // Predicated region
        $region29: #{tpu_custom_call.1} parent=27 // pred_check
          %p396 = pneg %p100
        $region30: #{tpu_custom_call.1} parent=27 // pred_check_branch
          %398 = sbr.rel (%p396) target = $region32
        $region31: #{tpu_custom_call.1} parent=27 // pred_region
          %s399 = smul.u32 16, %s21
          %401 = vsyncadd %s392, 0
          %s402 = sadd.s32 %s20, %s399
          %s403 = smul.addr %s402, 8
          %s404 = scalar_lea.hbm %s2, %s403
          %s405 = sshll.u32 %s395, 4
          %s406 = int_to_ptr.vmem [resolvable:$true] %s405
          %s407 = sshll.u32 %s404, 4
          %s408 = int_to_ptr.hbm [resolvable:$true] %s407
          %413 = dma.vmem_to_hbm [thread:$0]  %s406, 2048, %s408, %s392, 128, 128, 8
        $region32: #{tpu_custom_call.1} parent=27 // pred_fallthru
          _
      $region28: #{tpu_custom_call.1} parent=5 // pred_fallthru
        _
      %p414 = scmp.le.s32.totalorder 2, %s11
      // Predicated region
      $region33: #{tpu_custom_call.1} parent=5 // pred_check
        %p415 = pneg %p414
      $region34: #{tpu_custom_call.1} parent=5 // pred_check_branch
        %417 = sbr.rel (%p415) target = $region36
      $region35: #{tpu_custom_call.1} parent=5 // pred_region
        %s418 = ssub.s32 %s11, 2
        // Predicated region
        $region37: #{tpu_custom_call.1} parent=35 // pred_check
          %p419 = pneg %p106
        $region38: #{tpu_custom_call.1} parent=35 // pred_check_branch
          %421 = sbr.rel (%p419) target = $region40
        $region39: #{tpu_custom_call.1} parent=35 // pred_region
          %s422 = sand.u32 %s91, 1
          %s423 = scalar_lea.sflag [#allocation3], %s422
          %s424 = sand.u32 %s91, 1
          %s425 = smul.addr %s424, 128
          %s426 = scalar_lea.vmem [#allocation2], %s425
          %428 = dma.done %s423, 2048
        $region40: #{tpu_custom_call.1} parent=35 // pred_fallthru
          _
      $region36: #{tpu_custom_call.1} parent=5 // pred_fallthru
        _
    $region6: #{tpu_custom_call.1} parent=1 // loop_footer
      %s15 = sadd.s32 1, %s11
    $region7: #{tpu_custom_call.1} parent=1 // loop_footer_branch
      %10 = sbr.rel target = $region3
    $region8: #{tpu_custom_call.1} parent=1 // loop_exit
      _
    %429 = vsyncpa [#allocation3], 1
    %s430 = scalar_lea.sflag [#allocation3], 1
    %431 = vsyncpa %s430, 1

</llo_original>
